<compile_context>
chip_gen: v6e
topology: v6e:2x2x1
jax: 0.10.0
libtpu: 0.0.40
codegen_flags: <defaults>
</compile_context>

<pallas_src>
import functools

import jax
import jax.numpy as jnp
from jax import lax
from jax.experimental import pallas as pl
from jax.experimental.pallas import tpu as pltpu


def _bert_embeddings3_kernel(x_ref, w_ref, b_ref, pe_ref, g_ref, beta_ref,
                             o_ref, acc_ref, *, eps):
    # x_ref:    (tM, tV)  input-embedding K-slice for this M tile
    # w_ref:    (tV, H)   word-embeddings Linear weight K-slice, (K, N) layout
    # b_ref:    (1, H)    Linear bias
    # pe_ref:   (tM, H)   position-embedding rows for this M tile
    # g_ref:    (1, H)    LayerNorm gamma
    # beta_ref: (1, H)    LayerNorm beta
    # o_ref:    (tM, H)   output tile
    # acc_ref:  (tM, H)   f32 accumulator scratch (persists across k steps)
    k = pl.program_id(1)

    @pl.when(k == 0)
    def _():
        acc_ref[...] = jnp.zeros_like(acc_ref)

    # Pure MXU work on every K step: acc += x_k @ W_k  (f32 accumulation).
    acc_ref[...] += jnp.dot(x_ref[...], w_ref[...],
                            preferred_element_type=jnp.float32)

    # Epilogue once per M tile: bias + position embeddings + LayerNorm.
    @pl.when(k == pl.num_programs(1) - 1)
    def _():
        y = acc_ref[...]
        y = y + b_ref[...].astype(jnp.float32)
        y = y + pe_ref[...].astype(jnp.float32)
        mean = jnp.mean(y, axis=-1, keepdims=True)
        centered = y - mean
        var = jnp.mean(centered * centered, axis=-1, keepdims=True)
        norm = centered * lax.rsqrt(var + eps)
        out = (norm * g_ref[...].astype(jnp.float32)
               + beta_ref[...].astype(jnp.float32))
        # TODO(synk): dropout omitted (eval-mode nn.Dropout is the identity);
        # a training path would use pltpu.prng_seed / prng_random_bits.
        o_ref[...] = out.astype(o_ref.dtype)


def _round_up(x, m):
    return (x + m - 1) // m * m


def _pick_m_tile(M, S):
    # Largest tile (<= 2048) that divides M, is sublane-aligned, and lines up
    # with the sequence length so the position-embedding block index stays
    # trivial (constant when tM >= S, simple modulo when tM < S).
    for t in (2048, 1024, 512, 256, 128, 64, 32, 16, 8):
        if t <= M and M % t == 0 and (t % S == 0 or S % t == 0):
            return t
    return M  # fall back to the full (flattened) extent


def bert_embeddings3(inputs_embeds, word_w, word_b, pos_table,
                     ln_gamma, ln_beta, *, eps=1e-12):
    """inputs_embeds: (B, S, V); word_w: (H, V) PyTorch Linear weight;
    word_b: (H,); pos_table: (max_pos, H) with max_pos >= S;
    ln_gamma / ln_beta: (H,).  Returns (B, S, H)."""
    B, S, V = inputs_embeds.shape
    H = word_w.shape[0]
    M = B * S

    tM = _pick_m_tile(M, S)
    tV = 512
    V_pad = _round_up(V, tV)
    n_k = V_pad // tV

    # Flatten (B, S) -> M rows; pre-transpose weight once to (K, N) = (V, H).
    x2d = inputs_embeds.reshape(M, V)
    w_vh = jnp.transpose(word_w)                           # (V, H)
    if V_pad != V:
        x2d = jnp.pad(x2d, ((0, 0), (0, V_pad - V)))
        w_vh = jnp.pad(w_vh, ((0, V_pad - V), (0, 0)))

    b2d = word_b.reshape(1, H)
    g2d = ln_gamma.reshape(1, H)
    be2d = ln_beta.reshape(1, H)

    # Position rows seen by one M tile (position_ids = arange(S)).
    pos = pos_table[:S]
    if tM >= S:
        # One M tile spans tM // S full sequences -> constant (resident) block.
        pos_arr = jnp.tile(pos, (tM // S, 1))              # (tM, H)
        pos_map = lambda m, k: (0, 0)
    else:
        blocks_per_seq = S // tM
        pos_arr = pos                                       # (S, H)
        pos_map = lambda m, k: (m % blocks_per_seq, 0)

    kernel = functools.partial(_bert_embeddings3_kernel, eps=eps)

    out2d = pl.pallas_call(
        kernel,
        out_shape=jax.ShapeDtypeStruct((M, H), inputs_embeds.dtype),
        grid_spec=pltpu.PrefetchScalarGridSpec(
            num_scalar_prefetch=0,
            grid=(M // tM, n_k),
            in_specs=[
                pl.BlockSpec((tM, tV), lambda m, k: (m, k)),   # x K-slice
                pl.BlockSpec((tV, H), lambda m, k: (k, 0)),    # weight K-slice
                pl.BlockSpec((1, H), lambda m, k: (0, 0)),     # Linear bias
                pl.BlockSpec((tM, H), pos_map),                # position emb
                pl.BlockSpec((1, H), lambda m, k: (0, 0)),     # LN gamma
                pl.BlockSpec((1, H), lambda m, k: (0, 0)),     # LN beta
            ],
            out_specs=pl.BlockSpec((tM, H), lambda m, k: (m, 0)),
            scratch_shapes=[pltpu.VMEM((tM, H), jnp.float32)],
        ),
        compiler_params=pltpu.CompilerParams(
            dimension_semantics=("parallel", "arbitrary"),
            vmem_limit_bytes=64 * 1024 * 1024,
        ),
    )(x2d, w_vh, b2d, pos_arr, g2d, be2d)

    return out2d.reshape(B, S, H)


if __name__ == "__main__":
    # Small synthetic config: batch=2, seq=8 (== max_position_embeddings),
    # vocab_size=16, hidden=32.
    B, S, V, H = 2, 8, 16, 32
    eps = 1e-12

    key = jax.random.PRNGKey(0)
    kx, kw, kb, kp, kg, kbe = jax.random.split(key, 6)

    x = jax.random.normal(kx, (B, S, V), dtype=jnp.float32)
    bound = 1.0 / (V ** 0.5)
    word_w = jax.random.uniform(kw, (H, V), jnp.float32, -bound, bound)
    word_b = jax.random.uniform(kb, (H,), jnp.float32, -bound, bound)
    pos_table = 0.02 * jax.random.normal(kp, (S, H), dtype=jnp.float32)
    ln_gamma = 1.0 + 0.1 * jax.random.normal(kg, (H,), dtype=jnp.float32)
    ln_beta = 0.1 * jax.random.normal(kbe, (H,), dtype=jnp.float32)

    out = bert_embeddings3(x, word_w, word_b, pos_table, ln_gamma, ln_beta,
                           eps=eps)
    out = jax.block_until_ready(out)

    # Plain-JAX reference.
    emb = x @ word_w.T + word_b
    emb = emb + pos_table[None, :S]
    mean = emb.mean(-1, keepdims=True)
    var = ((emb - mean) ** 2).mean(-1, keepdims=True)
    ref = (emb - mean) / jnp.sqrt(var + eps) * ln_gamma + ln_beta

    assert out.shape == (B, S, H)
    max_err = float(jnp.max(jnp.abs(out - ref)))
    assert jnp.allclose(out, ref, atol=1e-4, rtol=1e-4), max_err

    print("KERNEL_OK")
</pallas_src>

<mosaic_0001>
module attributes {stable_mosaic.version = 11 : i64} {
  func.func @_bert_embeddings3_kernel(%arg0: i32, %arg1: i32, %arg2: memref<16x512xf32, #tpu.memory_space<vmem>>, %arg3: memref<512x32xf32, #tpu.memory_space<vmem>>, %arg4: memref<1x32xf32, #tpu.memory_space<vmem>>, %arg5: memref<16x32xf32, #tpu.memory_space<vmem>>, %arg6: memref<1x32xf32, #tpu.memory_space<vmem>>, %arg7: memref<1x32xf32, #tpu.memory_space<vmem>>, %arg8: memref<16x32xf32, #tpu.memory_space<vmem>>, %arg9: memref<16x32xf32, #tpu.memory_space<vmem>>) attributes {dimension_semantics = [#tpu.dimension_semantics<parallel>, #tpu.dimension_semantics<arbitrary>], iteration_bounds = array<i64: 1, 1>, scalar_prefetch = 0 : i64, scratch_operands = 1 : i64, tpu.core_type = #tpu.core_type<tc>, window_params = [{transform_indices = @transform_0, window_bounds = array<i64: 16, 512>}, {transform_indices = @transform_1, window_bounds = array<i64: 512, 32>}, {pipeline_mode = #tpu.pipeline_mode<synchronous>, transform_indices = @transform_2, window_bounds = array<i64: 1, 32>}, {pipeline_mode = #tpu.pipeline_mode<synchronous>, transform_indices = @transform_3, window_bounds = array<i64: 16, 32>}, {pipeline_mode = #tpu.pipeline_mode<synchronous>, transform_indices = @transform_4, window_bounds = array<i64: 1, 32>}, {pipeline_mode = #tpu.pipeline_mode<synchronous>, transform_indices = @transform_5, window_bounds = array<i64: 1, 32>}, {transform_indices = @transform_6, window_bounds = array<i64: 16, 32>}]} {
    %c0_i32 = arith.constant 0 : i32
    %0 = arith.cmpi eq, %arg1, %c0_i32 : i32
    %1 = arith.extui %0 : i1 to i32
    %c0_i32_0 = arith.constant 0 : i32
    %2 = arith.cmpi ne, %1, %c0_i32_0 : i32
    scf.if %2 {
      %cst_10 = arith.constant 0.000000e+00 : f32
      %12 = vector.broadcast %cst_10 : f32 to vector<16x32xf32>
      %c0_11 = arith.constant 0 : index
      %c0_12 = arith.constant 0 : index
      %13 = vector.load %arg9[%c0_11, %c0_12] : memref<16x32xf32, #tpu.memory_space<vmem>>, vector<16x32xf32>
      tpu.vector_store %arg9[%c0_11, %c0_12], %12 {strides = array<i32>} : memref<16x32xf32, #tpu.memory_space<vmem>>, vector<16x32xf32>,
    } else {
    }
    %c0 = arith.constant 0 : index
    %c0_1 = arith.constant 0 : index
    %3 = vector.load %arg9[%c0, %c0_1] : memref<16x32xf32, #tpu.memory_space<vmem>>, vector<16x32xf32>
    %c0_2 = arith.constant 0 : index
    %c0_3 = arith.constant 0 : index
    %4 = vector.load %arg2[%c0_2, %c0_3] : memref<16x512xf32, #tpu.memory_space<vmem>>, vector<16x512xf32>
    %c0_4 = arith.constant 0 : index
    %c0_5 = arith.constant 0 : index
    %5 = vector.load %arg3[%c0_4, %c0_5] : memref<512x32xf32, #tpu.memory_space<vmem>>, vector<512x32xf32>
    %cst = arith.constant dense<0.000000e+00> : vector<16x32xf32>
    %6 = tpu.matmul %4, %5, %cst {dimension_numbers = #tpu.dot_dimension_numbers<[1], [0], [0], [1], [0, 0, 1, 1], [], []>} : vector<16x512xf32>, vector<512x32xf32>, vector<16x32xf32> -> vector<16x32xf32>
    %7 = arith.addf %3, %6 : vector<16x32xf32>
    %c0_6 = arith.constant 0 : index
    %c0_7 = arith.constant 0 : index
    %8 = vector.load %arg9[%c0_6, %c0_7] : memref<16x32xf32, #tpu.memory_space<vmem>>, vector<16x32xf32>
    tpu.vector_store %arg9[%c0_6, %c0_7], %7 {strides = array<i32>} : memref<16x32xf32, #tpu.memory_space<vmem>>, vector<16x32xf32>,
    %c0_i32_8 = arith.constant 0 : i32
    %9 = arith.cmpi eq, %arg1, %c0_i32_8 : i32
    %10 = arith.extui %9 : i1 to i32
    %c0_i32_9 = arith.constant 0 : i32
    %11 = arith.cmpi ne, %10, %c0_i32_9 : i32
    scf.if %11 {
      %c0_10 = arith.constant 0 : index
      %c0_11 = arith.constant 0 : index
      %12 = vector.load %arg9[%c0_10, %c0_11] : memref<16x32xf32, #tpu.memory_space<vmem>>, vector<16x32xf32>
      %c0_12 = arith.constant 0 : index
      %c0_13 = arith.constant 0 : index
      %13 = vector.load %arg4[%c0_12, %c0_13] : memref<1x32xf32, #tpu.memory_space<vmem>>, vector<1x32xf32>
      %14 = vector.broadcast %13 : vector<1x32xf32> to vector<16x32xf32>
      %15 = arith.addf %12, %14 : vector<16x32xf32>
      %c0_14 = arith.constant 0 : index
      %c0_15 = arith.constant 0 : index
      %16 = vector.load %arg5[%c0_14, %c0_15] : memref<16x32xf32, #tpu.memory_space<vmem>>, vector<16x32xf32>
      %17 = arith.addf %15, %16 : vector<16x32xf32>
      %cst_16 = arith.constant dense<0.000000e+00> : vector<16xf32>
      %18 = vector.multi_reduction <add>, %17, %cst_16 [1] : vector<16x32xf32> to vector<16xf32>
      %19 = vector.shape_cast %18 : vector<16xf32> to vector<16x1xf32>
      %cst_17 = arith.constant 3.200000e+01 : f32
      %20 = vector.broadcast %cst_17 : f32 to vector<16x1xf32>
      %21 = arith.divf %19, %20 : vector<16x1xf32>
      %22 = vector.broadcast %21 : vector<16x1xf32> to vector<16x32xf32>
      %23 = arith.subf %17, %22 : vector<16x32xf32>
      %24 = arith.mulf %23, %23 : vector<16x32xf32>
      %cst_18 = arith.constant dense<0.000000e+00> : vector<16xf32>
      %25 = vector.multi_reduction <add>, %24, %cst_18 [1] : vector<16x32xf32> to vector<16xf32>
      %26 = vector.shape_cast %25 : vector<16xf32> to vector<16x1xf32>
      %cst_19 = arith.constant 3.200000e+01 : f32
      %27 = vector.broadcast %cst_19 : f32 to vector<16x1xf32>
      %28 = arith.divf %26, %27 : vector<16x1xf32>
      %cst_20 = arith.constant 9.99999996E-13 : f32
      %29 = vector.broadcast %cst_20 : f32 to vector<16x1xf32>
      %30 = arith.addf %28, %29 : vector<16x1xf32>
      %31 = math.rsqrt %30 : vector<16x1xf32>
      %32 = vector.broadcast %31 : vector<16x1xf32> to vector<16x32xf32>
      %33 = arith.mulf %23, %32 : vector<16x32xf32>
      %c0_21 = arith.constant 0 : index
      %c0_22 = arith.constant 0 : index
      %34 = vector.load %arg6[%c0_21, %c0_22] : memref<1x32xf32, #tpu.memory_space<vmem>>, vector<1x32xf32>
      %35 = vector.broadcast %34 : vector<1x32xf32> to vector<16x32xf32>
      %36 = arith.mulf %33, %35 : vector<16x32xf32>
      %c0_23 = arith.constant 0 : index
      %c0_24 = arith.constant 0 : index
      %37 = vector.load %arg7[%c0_23, %c0_24] : memref<1x32xf32, #tpu.memory_space<vmem>>, vector<1x32xf32>
      %38 = vector.broadcast %37 : vector<1x32xf32> to vector<16x32xf32>
      %39 = arith.addf %36, %38 : vector<16x32xf32>
      %c0_25 = arith.constant 0 : index
      %c0_26 = arith.constant 0 : index
      %40 = vector.load %arg8[%c0_25, %c0_26] : memref<16x32xf32, #tpu.memory_space<vmem>>, vector<16x32xf32>
      tpu.vector_store %arg8[%c0_25, %c0_26], %39 {strides = array<i32>} : memref<16x32xf32, #tpu.memory_space<vmem>>, vector<16x32xf32>,
    } else {
    }
    return
  }
  func.func @transform_0(%arg0: i32, %arg1: i32) -> (i32, i32) {
    %c0_i32 = arith.constant 0 : i32
    return %arg0, %arg1 : i32, i32
  }
  func.func @transform_1(%arg0: i32, %arg1: i32) -> (i32, i32) {
    %c0_i32 = arith.constant 0 : i32
    %c0_i32_0 = arith.constant 0 : i32
    return %arg1, %c0_i32 : i32, i32
  }
  func.func @transform_2(%arg0: i32, %arg1: i32) -> (i32, i32) {
    %c0_i32 = arith.constant 0 : i32
    %c0_i32_0 = arith.constant 0 : i32
    %c0_i32_1 = arith.constant 0 : i32
    return %c0_i32, %c0_i32_0 : i32, i32
  }
  func.func @transform_3(%arg0: i32, %arg1: i32) -> (i32, i32) {
    %c0_i32 = arith.constant 0 : i32
    %c0_i32_0 = arith.constant 0 : i32
    %c0_i32_1 = arith.constant 0 : i32
    return %c0_i32, %c0_i32_0 : i32, i32
  }
  func.func @transform_4(%arg0: i32, %arg1: i32) -> (i32, i32) {
    %c0_i32 = arith.constant 0 : i32
    %c0_i32_0 = arith.constant 0 : i32
    %c0_i32_1 = arith.constant 0 : i32
    return %c0_i32, %c0_i32_0 : i32, i32
  }
  func.func @transform_5(%arg0: i32, %arg1: i32) -> (i32, i32) {
    %c0_i32 = arith.constant 0 : i32
    %c0_i32_0 = arith.constant 0 : i32
    %c0_i32_1 = arith.constant 0 : i32
    return %c0_i32, %c0_i32_0 : i32, i32
  }
  func.func @transform_6(%arg0: i32, %arg1: i32) -> (i32, i32) {
    %c0_i32 = arith.constant 0 : i32
    %c0_i32_0 = arith.constant 0 : i32
    return %arg0, %c0_i32 : i32, i32
  }
}

</mosaic_0001>

<llo_original>
// kernel: tpu_custom_call.1
$region0: #{tpu_custom_call.1}
  #allocation0 [shape = 'u32[]', space=smem, size = 0x4, offset = 0x4, fixed_abs, tag = 'smem constant byte address 0x4 - core index']
  #allocation1 [shape = 'u32[144,128]{1,0:T(1,128)}', space=vmem, size = 0x12000, scoped, tag = 'internal scratch']
  #allocation2 [shape = 'f32[16,32]{1,0:T(8,128)}', space=vmem, size = 0x2000, scoped, tag = 'scratch operand']
  %s0 = inlined_call_operand.vmem [shape: f32[16,512], index: 0, kind: input, shape index: {}]
  %s1 = inlined_call_operand.vmem [shape: f32[512,32], index: 1, kind: input, shape index: {}]
  %s2 = inlined_call_operand.vmem [shape: f32[1,32], index: 2, kind: input, shape index: {}]
  %s3 = inlined_call_operand.vmem [shape: f32[16,32], index: 3, kind: input, shape index: {}]
  %s4 = inlined_call_operand.vmem [shape: f32[1,32], index: 4, kind: input, shape index: {}]
  %s5 = inlined_call_operand.vmem [shape: f32[1,32], index: 5, kind: input, shape index: {}]
  %s6 = inlined_call_operand.hbm [shape: f32[16,32], index: 6, kind: output, shape index: {}]
  %s7 = sld [smem:[#allocation0]]
  $region42: #{tpu_custom_call.1} parent=0
    _
  %s9 = ssub.s32 1, %s7
  %s10 = scalar_select 0, %s9, %s7
  $region1: #{tpu_custom_call.1} parent=0
    #allocation3 [shape = 'u8[8192]{0}', space=vmem, size = 0x2000, scoped, tag = 'output window, operand 0, single buffered']
    #allocation4 [shape = 's32[1]{0}', space=sflag, size = 0x4, scoped, tag = 'scoped memory for tpu_custom_call.1']
    %11 = vsyncpa [#allocation4], 0
    // Predicated region
    $region2: #{tpu_custom_call.1} parent=1 // pred_check
      _
    $region3: #{tpu_custom_call.1} parent=1 // pred_check_branch
      %13 = sbr.rel (0) target = $region5
    $region4: #{tpu_custom_call.1} parent=1 // pred_region
      _
    $region5: #{tpu_custom_call.1} parent=1 // pred_fallthru
      _
    // Predicated region
    $region6: #{tpu_custom_call.1} parent=1 // pred_check
      _
    $region7: #{tpu_custom_call.1} parent=1 // pred_check_branch
      %15 = sbr.rel (0) target = $region9
    $region8: #{tpu_custom_call.1} parent=1 // pred_region
      _
    $region9: #{tpu_custom_call.1} parent=1 // pred_fallthru
      _
    // Predicated region
    $region10: #{tpu_custom_call.1} parent=1 // pred_check
      _
    $region11: #{tpu_custom_call.1} parent=1 // pred_check_branch
      %17 = sbr.rel (0) target = $region13
    $region12: #{tpu_custom_call.1} parent=1 // pred_region
      _
    $region13: #{tpu_custom_call.1} parent=1 // pred_fallthru
      _
    // Predicated region
    $region14: #{tpu_custom_call.1} parent=1 // pred_check
      _
    $region15: #{tpu_custom_call.1} parent=1 // pred_check_branch
      %19 = sbr.rel (0) target = $region17
    $region16: #{tpu_custom_call.1} parent=1 // pred_region
      _
    $region17: #{tpu_custom_call.1} parent=1 // pred_fallthru
      _
    // Predicated region
    $region18: #{tpu_custom_call.1} parent=1 // pred_check
      _
    $region19: #{tpu_custom_call.1} parent=1 // pred_check_branch
      %21 = sbr.rel (0) target = $region21
    $region20: #{tpu_custom_call.1} parent=1 // pred_region
      _
    $region21: #{tpu_custom_call.1} parent=1 // pred_fallthru
      _
    // Predicated region
    $region22: #{tpu_custom_call.1} parent=1 // pred_check
      _
    $region23: #{tpu_custom_call.1} parent=1 // pred_check_branch
      %23 = sbr.rel (0) target = $region25
    $region24: #{tpu_custom_call.1} parent=1 // pred_region
      _
    $region25: #{tpu_custom_call.1} parent=1 // pred_fallthru
      _
    %p24 = scmp.eq.s32.totalorder 0, 0
    // Predicated region
    $region26: #{tpu_custom_call.1} parent=1 // pred_check
      %p25 = pneg %p24
    $region27: #{tpu_custom_call.1} parent=1 // pred_check_branch
      %27 = sbr.rel (%p25) target = $region29
    $region28: #{tpu_custom_call.1} parent=1 // pred_region
      %vm28 = vcmask 261120
      %29 = vst.msk [vmem:[#allocation2] sm:$0xff] %vm28, 0.0
      %30 = vst.msk [vmem:[#allocation2 + $0x8] sm:$0xff] %vm28, 0.0
    $region29: #{tpu_custom_call.1} parent=1 // pred_fallthru
      _
    %v31 = vld [vmem:[#allocation2] sm:$0xff]
    %v32 = vld [vmem:[#allocation2 + $0x8] sm:$0xff]
    %v33 = vld [vmem:[%s0] sm:$0xff]
    %v34 = vld [vmem:[%s0 + $0x8] sm:$0xff]
    %v35 = vld [vmem:[%s0 + $0x10] sm:$0xff]
    %v36 = vld [vmem:[%s0 + $0x18] sm:$0xff]
    %v37 = vld [vmem:[%s0 + $0x20] sm:$0xff]
    %v38 = vld [vmem:[%s0 + $0x28] sm:$0xff]
    %v39 = vld [vmem:[%s0 + $0x30] sm:$0xff]
    %v40 = vld [vmem:[%s0 + $0x38] sm:$0xff]
    %v41 = vld [vmem:[%s1] sm:$0xff]
    %v42 = vld [vmem:[%s1 + $0x8] sm:$0xff]
    %v43 = vld [vmem:[%s1 + $0x10] sm:$0xff]
    %v44 = vld [vmem:[%s1 + $0x18] sm:$0xff]
    %v45 = vld [vmem:[%s1 + $0x20] sm:$0xff]
    %v46 = vld [vmem:[%s1 + $0x28] sm:$0xff]
    %v47 = vld [vmem:[%s1 + $0x30] sm:$0xff]
    %v48 = vld [vmem:[%s1 + $0x38] sm:$0xff]
    %v49 = vld [vmem:[%s1 + $0x40] sm:$0xff]
    %v50 = vld [vmem:[%s1 + $0x48] sm:$0xff]
    %v51 = vld [vmem:[%s1 + $0x50] sm:$0xff]
    %v52 = vld [vmem:[%s1 + $0x58] sm:$0xff]
    %v53 = vld [vmem:[%s1 + $0x60] sm:$0xff]
    %v54 = vld [vmem:[%s1 + $0x68] sm:$0xff]
    %v55 = vld [vmem:[%s1 + $0x70] sm:$0xff]
    %v56 = vld [vmem:[%s1 + $0x78] sm:$0xff]
    %v57 = vld [vmem:[%s1 + $0x80] sm:$0xff]
    %v58 = vld [vmem:[%s1 + $0x88] sm:$0xff]
    %v59 = vld [vmem:[%s1 + $0x90] sm:$0xff]
    %v60 = vld [vmem:[%s1 + $0x98] sm:$0xff]
    %v61 = vld [vmem:[%s1 + $0xa0] sm:$0xff]
    %v62 = vld [vmem:[%s1 + $0xa8] sm:$0xff]
    %v63 = vld [vmem:[%s1 + $0xb0] sm:$0xff]
    %v64 = vld [vmem:[%s1 + $0xb8] sm:$0xff]
    %v65 = vld [vmem:[%s1 + $0xc0] sm:$0xff]
    %v66 = vld [vmem:[%s1 + $0xc8] sm:$0xff]
    %v67 = vld [vmem:[%s1 + $0xd0] sm:$0xff]
    %v68 = vld [vmem:[%s1 + $0xd8] sm:$0xff]
    %v69 = vld [vmem:[%s1 + $0xe0] sm:$0xff]
    %v70 = vld [vmem:[%s1 + $0xe8] sm:$0xff]
    %v71 = vld [vmem:[%s1 + $0xf0] sm:$0xff]
    %v72 = vld [vmem:[%s1 + $0xf8] sm:$0xff]
    %v73 = vld [vmem:[%s1 + $0x100] sm:$0xff]
    %v74 = vld [vmem:[%s1 + $0x108] sm:$0xff]
    %v75 = vld [vmem:[%s1 + $0x110] sm:$0xff]
    %v76 = vld [vmem:[%s1 + $0x118] sm:$0xff]
    %v77 = vld [vmem:[%s1 + $0x120] sm:$0xff]
    %v78 = vld [vmem:[%s1 + $0x128] sm:$0xff]
    %v79 = vld [vmem:[%s1 + $0x130] sm:$0xff]
    %v80 = vld [vmem:[%s1 + $0x138] sm:$0xff]
    %v81 = vld [vmem:[%s1 + $0x140] sm:$0xff]
    %v82 = vld [vmem:[%s1 + $0x148] sm:$0xff]
    %v83 = vld [vmem:[%s1 + $0x150] sm:$0xff]
    %v84 = vld [vmem:[%s1 + $0x158] sm:$0xff]
    %v85 = vld [vmem:[%s1 + $0x160] sm:$0xff]
    %v86 = vld [vmem:[%s1 + $0x168] sm:$0xff]
    %v87 = vld [vmem:[%s1 + $0x170] sm:$0xff]
    %v88 = vld [vmem:[%s1 + $0x178] sm:$0xff]
    %v89 = vld [vmem:[%s1 + $0x180] sm:$0xff]
    %v90 = vld [vmem:[%s1 + $0x188] sm:$0xff]
    %v91 = vld [vmem:[%s1 + $0x190] sm:$0xff]
    %v92 = vld [vmem:[%s1 + $0x198] sm:$0xff]
    %v93 = vld [vmem:[%s1 + $0x1a0] sm:$0xff]
    %v94 = vld [vmem:[%s1 + $0x1a8] sm:$0xff]
    %v95 = vld [vmem:[%s1 + $0x1b0] sm:$0xff]
    %v96 = vld [vmem:[%s1 + $0x1b8] sm:$0xff]
    %v97 = vld [vmem:[%s1 + $0x1c0] sm:$0xff]
    %v98 = vld [vmem:[%s1 + $0x1c8] sm:$0xff]
    %v99 = vld [vmem:[%s1 + $0x1d0] sm:$0xff]
    %v100 = vld [vmem:[%s1 + $0x1d8] sm:$0xff]
    %v101 = vld [vmem:[%s1 + $0x1e0] sm:$0xff]
    %v102 = vld [vmem:[%s1 + $0x1e8] sm:$0xff]
    %v103 = vld [vmem:[%s1 + $0x1f0] sm:$0xff]
    %v104 = vld [vmem:[%s1 + $0x1f8] sm:$0xff]
    %105 = vmatprep.subr.mxu0 0.0
    %106 = vmatpush1.msra.mxu0 %v56
    %107 = vmatprep.subr.mxu0 0.0
    %108 = vmatpush1.msra.mxu0 %v55
    %109 = vmatprep.subr.mxu0 0.0
    %110 = vmatpush1.msra.mxu0 %v54
    %111 = vmatprep.subr.mxu0 0.0
    %112 = vmatpush1.msra.mxu0 %v53
    %113 = vmatprep.subr.mxu0 0.0
    %114 = vmatpush1.msra.mxu0 %v52
    %115 = vmatprep.subr.mxu0 0.0
    %116 = vmatpush1.msra.mxu0 %v51
    %117 = vmatprep.subr.mxu0 0.0
    %118 = vmatpush1.msra.mxu0 %v50
    %119 = vmatprep.subr.mxu0 0.0
    %120 = vmatpush1.msra.mxu0 %v49
    %121 = vmatprep.subr.mxu0 0.0
    %122 = vmatpush1.msra.mxu0 %v48
    %123 = vmatprep.subr.mxu0 0.0
    %124 = vmatpush1.msra.mxu0 %v47
    %125 = vmatprep.subr.mxu0 0.0
    %126 = vmatpush1.msra.mxu0 %v46
    %127 = vmatprep.subr.mxu0 0.0
    %128 = vmatpush1.msra.mxu0 %v45
    %129 = vmatprep.subr.mxu0 0.0
    %130 = vmatpush1.msra.mxu0 %v44
    %131 = vmatprep.subr.mxu0 0.0
    %132 = vmatpush1.msra.mxu0 %v43
    %133 = vmatprep.subr.mxu0 0.0
    %134 = vmatpush1.msra.mxu0 %v42
    %135 = vmatprep.subr.mxu0 0.0
    %136 = vmatpush1.msra.mxu0 %v41
    %137 = vmatprep.subr.mxu0 0.0
    %138 = vmatpush2.msra.mxu0 %v72
    %139 = vmatprep.subr.mxu0 0.0
    %140 = vmatpush2.msra.mxu0 %v71
    %141 = vmatprep.subr.mxu0 0.0
    %142 = vmatpush2.msra.mxu0 %v70
    %143 = vmatprep.subr.mxu0 0.0
    %144 = vmatpush2.msra.mxu0 %v69
    %145 = vmatprep.subr.mxu0 0.0
    %146 = vmatpush2.msra.mxu0 %v68
    %147 = vmatprep.subr.mxu0 0.0
    %148 = vmatpush2.msra.mxu0 %v67
    %149 = vmatprep.subr.mxu0 0.0
    %150 = vmatpush2.msra.mxu0 %v66
    %151 = vmatprep.subr.mxu0 0.0
    %152 = vmatpush2.msra.mxu0 %v65
    %153 = vmatprep.subr.mxu0 0.0
    %154 = vmatpush2.msra.mxu0 %v64
    %155 = vmatprep.subr.mxu0 0.0
    %156 = vmatpush2.msra.mxu0 %v63
    %157 = vmatprep.subr.mxu0 0.0
    %158 = vmatpush2.msra.mxu0 %v62
    %159 = vmatprep.subr.mxu0 0.0
    %160 = vmatpush2.msra.mxu0 %v61
    %161 = vmatprep.subr.mxu0 0.0
    %162 = vmatpush2.msra.mxu0 %v60
    %163 = vmatprep.subr.mxu0 0.0
    %164 = vmatpush2.msra.mxu0 %v59
    %165 = vmatprep.subr.mxu0 0.0
    %166 = vmatpush2.msra.mxu0 %v58
    %167 = vmatprep.subr.mxu0 0.0
    %168 = vmatpush2.msra.mxu0 %v57
    %169 = vmatprep.mubr.f32.mxu0 %v34
    %170 = vmatmul.mubr.f32.gmra.mxu0 %v33
    %v171 = vpop.f32.mrf.mxu0
    %v172 = vadd.f32 0.0, %v171
    %v173 = vpop.f32.mrf.mxu0
    %174 = vmatprep.mubr.f32.mxu0 %v38
    %175 = vmatmul.mubr.f32.gmra.mxu0 %v37
    %v176 = vpop.f32.mrf.mxu0
    %v177 = vadd.f32 0.0, %v176
    %v178 = vpop.f32.mrf.mxu0
    %179 = vdwg.mxu0
    %180 = vmatprep.subr.mxu0 0.0
    %181 = vmatpush1.msra.mxu0 %v88
    %182 = vmatprep.subr.mxu0 0.0
    %183 = vmatpush1.msra.mxu0 %v87
    %184 = vmatprep.subr.mxu0 0.0
    %185 = vmatpush1.msra.mxu0 %v86
    %186 = vmatprep.subr.mxu0 0.0
    %187 = vmatpush1.msra.mxu0 %v85
    %188 = vmatprep.subr.mxu0 0.0
    %189 = vmatpush1.msra.mxu0 %v84
    %190 = vmatprep.subr.mxu0 0.0
    %191 = vmatpush1.msra.mxu0 %v83
    %192 = vmatprep.subr.mxu0 0.0
    %193 = vmatpush1.msra.mxu0 %v82
    %194 = vmatprep.subr.mxu0 0.0
    %195 = vmatpush1.msra.mxu0 %v81
    %196 = vmatprep.subr.mxu0 0.0
    %197 = vmatpush1.msra.mxu0 %v80
    %198 = vmatprep.subr.mxu0 0.0
    %199 = vmatpush1.msra.mxu0 %v79
    %200 = vmatprep.subr.mxu0 0.0
    %201 = vmatpush1.msra.mxu0 %v78
    %202 = vmatprep.subr.mxu0 0.0
    %203 = vmatpush1.msra.mxu0 %v77
    %204 = vmatprep.subr.mxu0 0.0
    %205 = vmatpush1.msra.mxu0 %v76
    %206 = vmatprep.subr.mxu0 0.0
    %207 = vmatpush1.msra.mxu0 %v75
    %208 = vmatprep.subr.mxu0 0.0
    %209 = vmatpush1.msra.mxu0 %v74
    %210 = vmatprep.subr.mxu0 0.0
    %211 = vmatpush1.msra.mxu0 %v73
    %212 = vmatprep.subr.mxu0 0.0
    %213 = vmatpush2.msra.mxu0 %v104
    %214 = vmatprep.subr.mxu0 0.0
    %215 = vmatpush2.msra.mxu0 %v103
    %216 = vmatprep.subr.mxu0 0.0
    %217 = vmatpush2.msra.mxu0 %v102
    %218 = vmatprep.subr.mxu0 0.0
    %219 = vmatpush2.msra.mxu0 %v101
    %220 = vmatprep.subr.mxu0 0.0
    %221 = vmatpush2.msra.mxu0 %v100
    %222 = vmatprep.subr.mxu0 0.0
    %223 = vmatpush2.msra.mxu0 %v99
    %224 = vmatprep.subr.mxu0 0.0
    %225 = vmatpush2.msra.mxu0 %v98
    %226 = vmatprep.subr.mxu0 0.0
    %227 = vmatpush2.msra.mxu0 %v97
    %228 = vmatprep.subr.mxu0 0.0
    %229 = vmatpush2.msra.mxu0 %v96
    %230 = vmatprep.subr.mxu0 0.0
    %231 = vmatpush2.msra.mxu0 %v95
    %232 = vmatprep.subr.mxu0 0.0
    %233 = vmatpush2.msra.mxu0 %v94
    %234 = vmatprep.subr.mxu0 0.0
    %235 = vmatpush2.msra.mxu0 %v93
    %236 = vmatprep.subr.mxu0 0.0
    %237 = vmatpush2.msra.mxu0 %v92
    %238 = vmatprep.subr.mxu0 0.0
    %239 = vmatpush2.msra.mxu0 %v91
    %240 = vmatprep.subr.mxu0 0.0
    %241 = vmatpush2.msra.mxu0 %v90
    %242 = vmatprep.subr.mxu0 0.0
    %243 = vmatpush2.msra.mxu0 %v89
    %244 = vmatprep.mubr.f32.mxu0 %v36
    %245 = vmatmul.mubr.f32.gmra.mxu0 %v35
    %v246 = vpop.f32.mrf.mxu0
    %v247 = vadd.f32 %v172, %v246
    %v248 = vpop.f32.mrf.mxu0
    %249 = vmatprep.mubr.f32.mxu0 %v40
    %250 = vmatmul.mubr.f32.gmra.mxu0 %v39
    %v251 = vpop.f32.mrf.mxu0
    %v252 = vadd.f32 %v177, %v251
    %v253 = vpop.f32.mrf.mxu0
    %254 = vdwg.mxu0
    %v255 = vadd.f32 %v31, %v247
    %v256 = vadd.f32 %v32, %v252
    %vm257 = vcmask 261120
    %258 = vst.msk [vmem:[#allocation2] sm:$0xff] %vm257, %v255
    %259 = vst.msk [vmem:[#allocation2 + $0x8] sm:$0xff] %vm257, %v256
    // Predicated region
    $region30: #{tpu_custom_call.1} parent=1 // pred_check
      %p260 = pneg %p24
    $region31: #{tpu_custom_call.1} parent=1 // pred_check_branch
      %262 = sbr.rel (%p260) target = $region33
    $region32: #{tpu_custom_call.1} parent=1 // pred_region
      %v263 = vld [vmem:[#allocation2] sm:$0xff]
      %v264 = vld [vmem:[#allocation2 + $0x8] sm:$0xff]
      %v265 = vld [vmem:[%s2] sm:$0x1]
      %v267 = vlaneseq
      %v268 = vshrl.u32 %v267, 7
      %v269 = vsub.s32 0, %v268
      %v270 = vrot.slane %v265, %v269
      %v272 = vadd.f32 %v263, %v270
      %v273 = vadd.f32 %v264, %v270
      %v274 = vld [vmem:[%s3] sm:$0xff]
      %v275 = vld [vmem:[%s3 + $0x8] sm:$0xff]
      %v276 = vadd.f32 %v272, %v274
      %v277 = vadd.f32 %v273, %v275
      %v278 = vsel %vm257, %v276, 0.0
      %279 = vadd.xlane.f32.xlu0 %v278
      %v280 = vpop.xlane.xlu0 %279
      %v281 = vsel %vm257, %v277, 0.0
      %282 = vadd.xlane.f32.xlu0 %v281
      %v283 = vpop.xlane.xlu0 %282
      %v284 = vrcp.pop 32.0
      %v285 = vmul.f32 %v280, %v284
      %v286 = vmul.f32 %v283, %v284
      %v287 = vsub.f32 %v276, %v285
      %v288 = vsub.f32 %v277, %v286
      %v289 = vmul.f32 %v287, %v287
      %v290 = vmul.f32 %v288, %v288
      %v291 = vsel %vm257, %v289, 0.0
      %292 = vadd.xlane.f32.xlu0 %v291
      %v293 = vpop.xlane.xlu0 %292
      %v294 = vsel %vm257, %v290, 0.0
      %295 = vadd.xlane.f32.xlu0 %v294
      %v296 = vpop.xlane.xlu0 %295
      %v297 = vmul.f32 %v293, %v284
      %v298 = vmul.f32 %v296, %v284
      %v299 = vadd.f32 %v297, 1e-12
      %v300 = vadd.f32 %v298, 1e-12
      %v301 = vrsqrt.pop %v299
      %v302 = vrsqrt.pop %v300
      %v303 = vmul.f32 %v287, %v301
      %v304 = vmul.f32 %v288, %v302
      %v305 = vld [vmem:[%s4] sm:$0x1]
      %v307 = vlaneseq
      %v308 = vshrl.u32 %v307, 7
      %v309 = vsub.s32 0, %v308
      %v310 = vrot.slane %v305, %v309
      %v312 = vmul.f32 %v303, %v310
      %v313 = vmul.f32 %v304, %v310
      %v314 = vld [vmem:[%s5] sm:$0x1]
      %v316 = vlaneseq
      %v317 = vshrl.u32 %v316, 7
      %v318 = vsub.s32 0, %v317
      %v319 = vrot.slane %v314, %v318
      %v321 = vadd.f32 %v312, %v319
      %v322 = vadd.f32 %v313, %v319
      %323 = vst.msk [vmem:[#allocation3] sm:$0xff] %vm257, %v321
      %324 = vst.msk [vmem:[#allocation3 + $0x8] sm:$0xff] %vm257, %v322
    $region33: #{tpu_custom_call.1} parent=1 // pred_fallthru
      _
    // Predicated region
    $region34: #{tpu_custom_call.1} parent=1 // pred_check
      _
    $region35: #{tpu_custom_call.1} parent=1 // pred_check_branch
      %326 = sbr.rel (0) target = $region37
    $region36: #{tpu_custom_call.1} parent=1 // pred_region
      %s328 = ssub.s32 256, 256
      %329 = vsyncadd [#allocation4], %s328
      %s330 = sshll.u32 [#allocation3], 4
      %s331 = int_to_ptr.vmem [resolvable:$true] %s330
      %336 = dma.vmem_to_hbm [thread:$0]  %s331, 256, %s6, [#allocation4], 128, 128, 8
    $region37: #{tpu_custom_call.1} parent=1 // pred_fallthru
      _
    // Predicated region
    $region38: #{tpu_custom_call.1} parent=1 // pred_check
      _
    $region39: #{tpu_custom_call.1} parent=1 // pred_check_branch
      %338 = sbr.rel (0) target = $region41
    $region40: #{tpu_custom_call.1} parent=1 // pred_region
      %339 = dma.done [#allocation4], 256
    $region41: #{tpu_custom_call.1} parent=1 // pred_fallthru
      _
    %340 = vsyncpa [#allocation4], 1

</llo_original>
